<compile_context>
chip_gen: v7x
topology: tpu7x:2x2x1
jax: 0.10.0
libtpu: 0.0.40
codegen_flags: <defaults>
</compile_context>

<pallas_src>
import functools

import numpy as np
import jax
import jax.numpy as jnp
from jax.experimental import pallas as pl
from jax.experimental.pallas import tpu as pltpu


H1 = 64                   # fc1 out
H2_RAW, H2 = 126, 128     # fc2 out (raw -> lane-aligned pad)
H3_RAW, H3 = 252, 256     # fc3 out (raw -> lane-aligned pad)
ROW_ALIGN = 16            # batch-tile sublane alignment (covers f32 (8) and bf16 (16))
LANE = 128


def _round_up(x, m):
    return ((x + m - 1) // m) * m


def grade_fc_kernel(x_ref,
                    w1_ref, b1_ref,
                    w2_ref, b2_ref,
                    w3_ref, b3_ref,
                    wo_ref, bo_ref,
                    out_ref, *, ncomp):
    """One (TM, N_in) batch tile -> one (TM, OUT_PAD) lane-dense fused output tile.

    Fused output columns: [exp(loc) | 10*sigmoid(scale) | softmax(mix) | zeros pad].
    """
    x = x_ref[...]

    # fc1 -> relu (matmul operands may be bf16; accumulate + bias/relu in f32)
    h = jnp.dot(x, w1_ref[...], preferred_element_type=jnp.float32) + b1_ref[...]
    h = jnp.maximum(h, 0.0)

    # fc2 -> relu (output padded 126 -> 128; padded cols are exactly 0)
    h = jnp.dot(h.astype(w2_ref.dtype), w2_ref[...],
                preferred_element_type=jnp.float32) + b2_ref[...]
    h = jnp.maximum(h, 0.0)

    # fc3 -> relu (output padded 252 -> 256; padded cols are exactly 0)
    h = jnp.dot(h.astype(w3_ref.dtype), w3_ref[...],
                preferred_element_type=jnp.float32) + b3_ref[...]
    h = jnp.maximum(h, 0.0)

    # fcout (columns pre-permuted to [loc group | scale group | mix group],
    # then zero-padded out to OUT_PAD lanes)
    o = jnp.dot(h.astype(wo_ref.dtype), wo_ref[...],
                preferred_element_type=jnp.float32) + bo_ref[...]

    o_loc = o[:, 0 * ncomp:1 * ncomp]          # was output[:, :, 0]
    o_scl = o[:, 1 * ncomp:2 * ncomp]          # was output[:, :, 1]
    o_mix = o[:, 2 * ncomp:3 * ncomp]          # was output[:, :, 2]

    loc = jnp.exp(o_loc)
    scale = 10.0 * jax.nn.sigmoid(o_scl)

    # softmax over components with max-subtraction; exact divide (free under MXU).
    maxes = jnp.max(o_mix, axis=1, keepdims=True)
    e = jnp.exp(o_mix - maxes)
    mix = e / jnp.sum(e, axis=1, keepdims=True)

    # single lane-dense 128-wide store (no masked partial stores)
    parts = [loc, scale, mix]
    pad = out_ref.shape[1] - 3 * ncomp
    if pad > 0:
        parts.append(jnp.zeros((loc.shape[0], pad), jnp.float32))
    out_ref[...] = jnp.concatenate(parts, axis=1)


def init_params(key, n_in, ncomp):
    """Deterministic synthetic parameters. Weights in (in, out) layout, biases (1, out)."""
    dims = [(n_in, H1), (H1, H2_RAW), (H2_RAW, H3_RAW), (H3_RAW, ncomp * 3)]
    names = ["1", "2", "3", "o"]
    params = {}
    for name, (din, dout) in zip(names, dims):
        key, kw, kb = jax.random.split(key, 3)
        scale = 1.0 / jnp.sqrt(jnp.float32(din))
        params[f"w{name}"] = jax.random.normal(kw, (din, dout), jnp.float32) * scale
        params[f"b{name}"] = jax.random.normal(kb, (1, dout), jnp.float32) * 0.1
    return params


def prepare_params(params, ncomp, matmul_dtype=jnp.bfloat16):
    """One-time host-side prep: fcout column permutation, zero padding of ragged
    hidden dims (126->128, 252->256) and of the fused output width (3*ncomp ->
    multiple of 128 lanes). Weights cast to `matmul_dtype` (bf16 default);
    biases stay f32. All padding is a mathematical no-op."""
    out_w = 3 * ncomp
    out_pad = _round_up(out_w, LANE)

    # reshape(B, ncomp, 3)[:, :, k] picks columns k, k+3, k+6, ...  Group them
    # contiguously: [0,3,6,..., 1,4,7,..., 2,5,8,...]
    perm = np.concatenate([np.arange(ncomp) * 3 + k for k in range(3)])

    w1 = np.asarray(params["w1"], np.float32)
    b1 = np.asarray(params["b1"], np.float32)
    w2 = np.asarray(params["w2"], np.float32)
    b2 = np.asarray(params["b2"], np.float32)
    w3 = np.asarray(params["w3"], np.float32)
    b3 = np.asarray(params["b3"], np.float32)
    wo = np.asarray(params["wo"], np.float32)[:, perm]
    bo = np.asarray(params["bo"], np.float32)[:, perm]

    w2p = np.zeros((H1, H2), np.float32); w2p[:, :H2_RAW] = w2
    b2p = np.zeros((1, H2), np.float32);  b2p[:, :H2_RAW] = b2
    w3p = np.zeros((H2, H3), np.float32); w3p[:H2_RAW, :H3_RAW] = w3
    b3p = np.zeros((1, H3), np.float32);  b3p[:, :H3_RAW] = b3
    wop = np.zeros((H3, out_pad), np.float32); wop[:H3_RAW, :out_w] = wo
    bop = np.zeros((1, out_pad), np.float32);  bop[:, :out_w] = bo

    prep = {"w1": w1, "b1": b1, "w2": w2p, "b2": b2p,
            "w3": w3p, "b3": b3p, "wo": wop, "bo": bop}
    out = {}
    for k, v in prep.items():
        dt = matmul_dtype if k.startswith("w") else jnp.float32
        out[k] = jnp.asarray(v, dt)
    return out


def grade_fc_forward(x, prepared, ncomp, tm=1024):
    """x: (B, N_in) float32.  prepared: output of prepare_params().
    Returns (loc, scale, mixing), each (B, ncomp) float32."""
    B, n_in = x.shape
    out_pad = prepared["wo"].shape[1]

    # Divisor-aware batch tiling: waste <= ROW_ALIGN-1 rows per tile, and at
    # least 2 tiles whenever the batch allows it so v7x can shard the
    # "parallel" axis across both TensorCores (harmless on v5e/v6e).
    n_tiles = max(pl.cdiv(B, tm), min(2, pl.cdiv(B, ROW_ALIGN)))
    TM = _round_up(pl.cdiv(B, n_tiles), ROW_ALIGN)
    B_pad = n_tiles * TM
    if B_pad != B:
        x = jnp.pad(x, ((0, B_pad - B), (0, 0)))
    x = x.astype(prepared["w1"].dtype)

    def row_map(i):
        return (i, 0)

    def const_map(i):
        return (0, 0)    # weights stay VMEM-resident (no re-DMA across steps)

    weight_names = ["w1", "b1", "w2", "b2", "w3", "b3", "wo", "bo"]
    weight_args = [prepared[n] for n in weight_names]
    weight_specs = [pl.BlockSpec(a.shape, const_map) for a in weight_args]

    fused = pl.pallas_call(
        functools.partial(grade_fc_kernel, ncomp=ncomp),
        out_shape=jax.ShapeDtypeStruct((B_pad, out_pad), jnp.float32),
        grid=(n_tiles,),
        in_specs=[pl.BlockSpec((TM, n_in), row_map)] + weight_specs,
        out_specs=pl.BlockSpec((TM, out_pad), row_map),
        compiler_params=pltpu.CompilerParams(
            dimension_semantics=("parallel",)),
    )(x, *weight_args)

    loc = fused[:B, 0 * ncomp:1 * ncomp]
    scale = fused[:B, 1 * ncomp:2 * ncomp]
    mixing = fused[:B, 2 * ncomp:3 * ncomp]
    return loc, scale, mixing


def grade_fc_reference(x, params, ncomp):
    """Pure-JAX reference mirroring the PyTorch forward exactly (unpadded params)."""
    h = jnp.maximum(x @ params["w1"] + params["b1"], 0.0)
    h = jnp.maximum(h @ params["w2"] + params["b2"], 0.0)
    h = jnp.maximum(h @ params["w3"] + params["b3"], 0.0)
    out = (h @ params["wo"] + params["bo"]).reshape(x.shape[0], ncomp, 3)
    loc = jnp.exp(out[:, :, 0])
    scale = 10.0 * jax.nn.sigmoid(out[:, :, 1])
    maxes = out[:, :, 2].max(axis=1)[:, None]
    e = jnp.exp(out[:, :, 2] - maxes)
    mixing = e / e.sum(axis=1)[:, None]
    return loc, scale, mixing


if __name__ == "__main__":
    N_in = 32
    ncomp = 3

    key = jax.random.PRNGKey(0)
    key, kx = jax.random.split(key)
    params = init_params(key, N_in, ncomp)

    prepared_f32 = prepare_params(params, ncomp, matmul_dtype=jnp.float32)
    prepared_bf16 = prepare_params(params, ncomp)          # bf16 default (perf path)

    # (batch, tm, params, rtol, atol): f32 path checked tight (exact semantics),
    # default bf16 path checked loose against the f32 reference.
    checks = [
        (8,   512,  prepared_f32,  1e-5, 1e-5),
        (300, 128,  prepared_f32,  1e-5, 1e-5),
        (300, 1024, prepared_bf16, 1e-1, 5e-2),
    ]
    for batch, tm, prepared, rtol, atol in checks:
        kx, kb = jax.random.split(kx)
        x = jax.random.normal(kb, (batch, N_in), jnp.float32)

        loc, scale, mixing = grade_fc_forward(x, prepared, ncomp, tm=tm)
        jax.block_until_ready((loc, scale, mixing))

        r_loc, r_scale, r_mix = grade_fc_reference(x, params, ncomp)
        assert loc.shape == (batch, ncomp)
        assert scale.shape == (batch, ncomp)
        assert mixing.shape == (batch, ncomp)
        assert jnp.allclose(loc, r_loc, rtol=rtol, atol=atol)
        assert jnp.allclose(scale, r_scale, rtol=rtol, atol=atol)
        assert jnp.allclose(mixing, r_mix, rtol=rtol, atol=atol)
        # exact softmax divide -> mixing rows sum to 1 at f32 precision on both paths
        assert jnp.allclose(jnp.sum(mixing, axis=1), 1.0, atol=1e-5)

    print("KERNEL_OK")
</pallas_src>

<mosaic_0001>
module attributes {stable_mosaic.version = 11 : i64} {
  func.func @grade_fc_kernel(%arg0: i32, %arg1: memref<16x32xf32, #tpu.memory_space<vmem>>, %arg2: memref<32x64xf32, #tpu.memory_space<vmem>>, %arg3: memref<1x64xf32, #tpu.memory_space<vmem>>, %arg4: memref<64x128xf32, #tpu.memory_space<vmem>>, %arg5: memref<1x128xf32, #tpu.memory_space<vmem>>, %arg6: memref<128x256xf32, #tpu.memory_space<vmem>>, %arg7: memref<1x256xf32, #tpu.memory_space<vmem>>, %arg8: memref<256x128xf32, #tpu.memory_space<vmem>>, %arg9: memref<1x128xf32, #tpu.memory_space<vmem>>, %arg10: memref<16x128xf32, #tpu.memory_space<vmem>>) attributes {dimension_semantics = [#tpu.dimension_semantics<parallel>], iteration_bounds = array<i64: 1>, scalar_prefetch = 0 : i64, scratch_operands = 0 : i64, tpu.core_type = #tpu.core_type<tc>, window_params = [{transform_indices = @transform_0, window_bounds = array<i64: 16, 32>}, {pipeline_mode = #tpu.pipeline_mode<synchronous>, transform_indices = @transform_1, window_bounds = array<i64: 32, 64>}, {pipeline_mode = #tpu.pipeline_mode<synchronous>, transform_indices = @transform_2, window_bounds = array<i64: 1, 64>}, {pipeline_mode = #tpu.pipeline_mode<synchronous>, transform_indices = @transform_3, window_bounds = array<i64: 64, 128>}, {pipeline_mode = #tpu.pipeline_mode<synchronous>, transform_indices = @transform_4, window_bounds = array<i64: 1, 128>}, {pipeline_mode = #tpu.pipeline_mode<synchronous>, transform_indices = @transform_5, window_bounds = array<i64: 128, 256>}, {pipeline_mode = #tpu.pipeline_mode<synchronous>, transform_indices = @transform_6, window_bounds = array<i64: 1, 256>}, {pipeline_mode = #tpu.pipeline_mode<synchronous>, transform_indices = @transform_7, window_bounds = array<i64: 256, 128>}, {pipeline_mode = #tpu.pipeline_mode<synchronous>, transform_indices = @transform_8, window_bounds = array<i64: 1, 128>}, {transform_indices = @transform_9, window_bounds = array<i64: 16, 128>}]} {
    %c0 = arith.constant 0 : index
    %c0_0 = arith.constant 0 : index
    %0 = vector.load %arg1[%c0, %c0_0] : memref<16x32xf32, #tpu.memory_space<vmem>>, vector<16x32xf32>
    %c0_1 = arith.constant 0 : index
    %c0_2 = arith.constant 0 : index
    %1 = vector.load %arg2[%c0_1, %c0_2] : memref<32x64xf32, #tpu.memory_space<vmem>>, vector<32x64xf32>
    %cst = arith.constant dense<0.000000e+00> : vector<16x64xf32>
    %2 = tpu.matmul %0, %1, %cst {dimension_numbers = #tpu.dot_dimension_numbers<[1], [0], [0], [1], [0, 0, 1, 1], [], []>} : vector<16x32xf32>, vector<32x64xf32>, vector<16x64xf32> -> vector<16x64xf32>
    %c0_3 = arith.constant 0 : index
    %c0_4 = arith.constant 0 : index
    %3 = vector.load %arg3[%c0_3, %c0_4] : memref<1x64xf32, #tpu.memory_space<vmem>>, vector<1x64xf32>
    %4 = vector.broadcast %3 : vector<1x64xf32> to vector<16x64xf32>
    %5 = arith.addf %2, %4 : vector<16x64xf32>
    %cst_5 = arith.constant 0.000000e+00 : f32
    %6 = vector.broadcast %cst_5 : f32 to vector<16x64xf32>
    %7 = arith.maximumf %5, %6 : vector<16x64xf32>
    %c0_6 = arith.constant 0 : index
    %c0_7 = arith.constant 0 : index
    %8 = vector.load %arg4[%c0_6, %c0_7] : memref<64x128xf32, #tpu.memory_space<vmem>>, vector<64x128xf32>
    %cst_8 = arith.constant dense<0.000000e+00> : vector<16x128xf32>
    %9 = tpu.matmul %7, %8, %cst_8 {dimension_numbers = #tpu.dot_dimension_numbers<[1], [0], [0], [1], [0, 0, 1, 1], [], []>} : vector<16x64xf32>, vector<64x128xf32>, vector<16x128xf32> -> vector<16x128xf32>
    %c0_9 = arith.constant 0 : index
    %c0_10 = arith.constant 0 : index
    %10 = vector.load %arg5[%c0_9, %c0_10] : memref<1x128xf32, #tpu.memory_space<vmem>>, vector<1x128xf32>
    %11 = vector.broadcast %10 : vector<1x128xf32> to vector<16x128xf32>
    %12 = arith.addf %9, %11 : vector<16x128xf32>
    %cst_11 = arith.constant 0.000000e+00 : f32
    %13 = vector.broadcast %cst_11 : f32 to vector<16x128xf32>
    %14 = arith.maximumf %12, %13 : vector<16x128xf32>
    %c0_12 = arith.constant 0 : index
    %c0_13 = arith.constant 0 : index
    %15 = vector.load %arg6[%c0_12, %c0_13] : memref<128x256xf32, #tpu.memory_space<vmem>>, vector<128x256xf32>
    %cst_14 = arith.constant dense<0.000000e+00> : vector<16x256xf32>
    %16 = tpu.matmul %14, %15, %cst_14 {dimension_numbers = #tpu.dot_dimension_numbers<[1], [0], [0], [1], [0, 0, 1, 1], [], []>} : vector<16x128xf32>, vector<128x256xf32>, vector<16x256xf32> -> vector<16x256xf32>
    %c0_15 = arith.constant 0 : index
    %c0_16 = arith.constant 0 : index
    %17 = vector.load %arg7[%c0_15, %c0_16] : memref<1x256xf32, #tpu.memory_space<vmem>>, vector<1x256xf32>
    %18 = vector.broadcast %17 : vector<1x256xf32> to vector<16x256xf32>
    %19 = arith.addf %16, %18 : vector<16x256xf32>
    %cst_17 = arith.constant 0.000000e+00 : f32
    %20 = vector.broadcast %cst_17 : f32 to vector<16x256xf32>
    %21 = arith.maximumf %19, %20 : vector<16x256xf32>
    %c0_18 = arith.constant 0 : index
    %c0_19 = arith.constant 0 : index
    %22 = vector.load %arg8[%c0_18, %c0_19] : memref<256x128xf32, #tpu.memory_space<vmem>>, vector<256x128xf32>
    %cst_20 = arith.constant dense<0.000000e+00> : vector<16x128xf32>
    %23 = tpu.matmul %21, %22, %cst_20 {dimension_numbers = #tpu.dot_dimension_numbers<[1], [0], [0], [1], [0, 0, 1, 1], [], []>} : vector<16x256xf32>, vector<256x128xf32>, vector<16x128xf32> -> vector<16x128xf32>
    %c0_21 = arith.constant 0 : index
    %c0_22 = arith.constant 0 : index
    %24 = vector.load %arg9[%c0_21, %c0_22] : memref<1x128xf32, #tpu.memory_space<vmem>>, vector<1x128xf32>
    %25 = vector.broadcast %24 : vector<1x128xf32> to vector<16x128xf32>
    %26 = arith.addf %23, %25 : vector<16x128xf32>
    %27 = vector.extract_strided_slice %26 {offsets = [0, 0], sizes = [16, 3], strides = [1, 1]} : vector<16x128xf32> to vector<16x3xf32>
    %28 = vector.extract_strided_slice %26 {offsets = [0, 3], sizes = [16, 3], strides = [1, 1]} : vector<16x128xf32> to vector<16x3xf32>
    %29 = vector.extract_strided_slice %26 {offsets = [0, 6], sizes = [16, 3], strides = [1, 1]} : vector<16x128xf32> to vector<16x3xf32>
    %30 = math.exp %27 : vector<16x3xf32>
    %31 = arith.negf %28 : vector<16x3xf32>
    %32 = math.exp %31 : vector<16x3xf32>
    %cst_23 = arith.constant 1.000000e+00 : f32
    %33 = vector.broadcast %cst_23 : f32 to vector<16x3xf32>
    %34 = arith.addf %33, %32 : vector<16x3xf32>
    %35 = arith.divf %33, %34 : vector<16x3xf32>
    %cst_24 = arith.constant 1.000000e+01 : f32
    %36 = vector.broadcast %cst_24 : f32 to vector<16x3xf32>
    %37 = arith.mulf %36, %35 : vector<16x3xf32>
    %cst_25 = arith.constant dense<0xFF800000> : vector<16xf32>
    %38 = vector.multi_reduction <maximumf>, %29, %cst_25 [1] : vector<16x3xf32> to vector<16xf32>
    %39 = vector.shape_cast %38 : vector<16xf32> to vector<16x1xf32>
    %40 = vector.broadcast %39 : vector<16x1xf32> to vector<16x3xf32>
    %41 = arith.subf %29, %40 : vector<16x3xf32>
    %42 = math.exp %41 : vector<16x3xf32>
    %cst_26 = arith.constant dense<0.000000e+00> : vector<16xf32>
    %43 = vector.multi_reduction <add>, %42, %cst_26 [1] : vector<16x3xf32> to vector<16xf32>
    %44 = vector.shape_cast %43 : vector<16xf32> to vector<16x1xf32>
    %45 = vector.broadcast %44 : vector<16x1xf32> to vector<16x3xf32>
    %46 = arith.divf %42, %45 : vector<16x3xf32>
    %cst_27 = arith.constant 0.000000e+00 : f32
    %47 = vector.broadcast %cst_27 : f32 to vector<16x119xf32>
    %48 = tpu.concatenate %30, %37, %46, %47 in 1 : vector<16x3xf32>, vector<16x3xf32>, vector<16x3xf32>, vector<16x119xf32> -> vector<16x128xf32>
    %c0_28 = arith.constant 0 : index
    %c0_29 = arith.constant 0 : index
    %49 = vector.load %arg10[%c0_28, %c0_29] : memref<16x128xf32, #tpu.memory_space<vmem>>, vector<16x128xf32>
    tpu.vector_store %arg10[%c0_28, %c0_29], %48 {strides = array<i32>} : memref<16x128xf32, #tpu.memory_space<vmem>>, vector<16x128xf32>,
    return
  }
  func.func @transform_0(%arg0: i32) -> (i32, i32) {
    %c0_i32 = arith.constant 0 : i32
    %c0_i32_0 = arith.constant 0 : i32
    return %arg0, %c0_i32 : i32, i32
  }
  func.func @transform_1(%arg0: i32) -> (i32, i32) {
    %c0_i32 = arith.constant 0 : i32
    %c0_i32_0 = arith.constant 0 : i32
    %c0_i32_1 = arith.constant 0 : i32
    return %c0_i32, %c0_i32_0 : i32, i32
  }
  func.func @transform_2(%arg0: i32) -> (i32, i32) {
    %c0_i32 = arith.constant 0 : i32
    %c0_i32_0 = arith.constant 0 : i32
    %c0_i32_1 = arith.constant 0 : i32
    return %c0_i32, %c0_i32_0 : i32, i32
  }
  func.func @transform_3(%arg0: i32) -> (i32, i32) {
    %c0_i32 = arith.constant 0 : i32
    %c0_i32_0 = arith.constant 0 : i32
    %c0_i32_1 = arith.constant 0 : i32
    return %c0_i32, %c0_i32_0 : i32, i32
  }
  func.func @transform_4(%arg0: i32) -> (i32, i32) {
    %c0_i32 = arith.constant 0 : i32
    %c0_i32_0 = arith.constant 0 : i32
    %c0_i32_1 = arith.constant 0 : i32
    return %c0_i32, %c0_i32_0 : i32, i32
  }
  func.func @transform_5(%arg0: i32) -> (i32, i32) {
    %c0_i32 = arith.constant 0 : i32
    %c0_i32_0 = arith.constant 0 : i32
    %c0_i32_1 = arith.constant 0 : i32
    return %c0_i32, %c0_i32_0 : i32, i32
  }
  func.func @transform_6(%arg0: i32) -> (i32, i32) {
    %c0_i32 = arith.constant 0 : i32
    %c0_i32_0 = arith.constant 0 : i32
    %c0_i32_1 = arith.constant 0 : i32
    return %c0_i32, %c0_i32_0 : i32, i32
  }
  func.func @transform_7(%arg0: i32) -> (i32, i32) {
    %c0_i32 = arith.constant 0 : i32
    %c0_i32_0 = arith.constant 0 : i32
    %c0_i32_1 = arith.constant 0 : i32
    return %c0_i32, %c0_i32_0 : i32, i32
  }
  func.func @transform_8(%arg0: i32) -> (i32, i32) {
    %c0_i32 = arith.constant 0 : i32
    %c0_i32_0 = arith.constant 0 : i32
    %c0_i32_1 = arith.constant 0 : i32
    return %c0_i32, %c0_i32_0 : i32, i32
  }
  func.func @transform_9(%arg0: i32) -> (i32, i32) {
    %c0_i32 = arith.constant 0 : i32
    %c0_i32_0 = arith.constant 0 : i32
    return %arg0, %c0_i32 : i32, i32
  }
}

</mosaic_0001>

<llo_original>
// kernel: tpu_custom_call.1
$region0: #{tpu_custom_call.1}
  #allocation0 [shape = 'u32[]', space=smem, size = 0x4, offset = 0x4, fixed_abs, tag = 'smem constant byte address 0x4 - core index']
  #allocation1 [shape = 'u32[144,128]{1,0:T(1,128)}', space=vmem, size = 0x12000, scoped, tag = 'internal scratch']
  %s0 = inlined_call_operand.hbm [shape: f32[16,32], index: 0, kind: input, shape index: {}]
  %s1 = inlined_call_operand.hbm [shape: f32[32,64], index: 1, kind: input, shape index: {}]
  %s2 = inlined_call_operand.vmem [shape: f32[1,64], index: 2, kind: input, shape index: {}]
  %s3 = inlined_call_operand.hbm [shape: f32[64,128], index: 3, kind: input, shape index: {}]
  %s4 = inlined_call_operand.vmem [shape: f32[1,128], index: 4, kind: input, shape index: {}]
  %s5 = inlined_call_operand.hbm [shape: f32[128,256], index: 5, kind: input, shape index: {}]
  %s6 = inlined_call_operand.vmem [shape: f32[1,256], index: 6, kind: input, shape index: {}]
  %s7 = inlined_call_operand.hbm [shape: f32[256,128], index: 7, kind: input, shape index: {}]
  %s8 = inlined_call_operand.vmem [shape: f32[1,128], index: 8, kind: input, shape index: {}]
  %s9 = inlined_call_operand.hbm [shape: f32[16,128], index: 9, kind: output, shape index: {}]
  %s10 = sld [smem:[#allocation0]]
  $region66: #{tpu_custom_call.1} parent=0
    _
  %s12 = ssub.s32 1, %s10
  %s13 = scalar_select 0, %s12, %s10
  $region1: #{tpu_custom_call.1} parent=0
    #allocation2 [shape = 'u8[8192]{0}', space=vmem, size = 0x2000, scoped, tag = 'input window, operand 0, single buffered']
    #allocation3 [shape = 's32[1]{0}', space=sflag, size = 0x4, scoped, tag = 'scoped memory for tpu_custom_call.1']
    #allocation4 [shape = 's32[1]{0}', space=sflag, size = 0x4, scoped, tag = 'scoped memory for tpu_custom_call.1']
    #allocation5 [shape = 'u8[16384]{0}', space=vmem, size = 0x4000, scoped, tag = 'input window, operand 1, single buffered']
    #allocation6 [shape = 's32[1]{0}', space=sflag, size = 0x4, scoped, tag = 'scoped memory for tpu_custom_call.1']
    #allocation7 [shape = 'u8[32768]{0}', space=vmem, size = 0x8000, scoped, tag = 'input window, operand 3, single buffered']
    #allocation8 [shape = 'u8[131072]{0}', space=vmem, size = 0x20000, scoped, tag = 'input window, operand 5, single buffered']
    #allocation9 [shape = 's32[1]{0}', space=sflag, size = 0x4, scoped, tag = 'scoped memory for tpu_custom_call.1']
    #allocation10 [shape = 'u8[131072]{0}', space=vmem, size = 0x20000, scoped, tag = 'input window, operand 7, single buffered']
    #allocation11 [shape = 'u8[8192]{0}', space=vmem, size = 0x2000, scoped, tag = 'output window, operand 0, single buffered']
    %14 = vsyncpa [#allocation3], 0
    %15 = vsyncpa [#allocation6], 0
    %16 = vsyncpa [#allocation9], 0
    %17 = vsyncpa [#allocation4], 0
    // Predicated region
    $region2: #{tpu_custom_call.1} parent=1 // pred_check
      _
    $region3: #{tpu_custom_call.1} parent=1 // pred_check_branch
      %19 = sbr.rel (0) target = $region5
    $region4: #{tpu_custom_call.1} parent=1 // pred_region
      %s21 = ssub.s32 256, 256
      %22 = vsyncadd [#allocation3], %s21
      %s23 = sshll.u32 [#allocation2], 4
      %s24 = int_to_ptr.vmem [resolvable:$true] %s23
      %29 = dma.hbm_to_vmem [thread:$0]  %s0, 256, %s24, [#allocation3], 128, 128, 8
    $region5: #{tpu_custom_call.1} parent=1 // pred_fallthru
      _
    // Predicated region
    $region6: #{tpu_custom_call.1} parent=1 // pred_check
      _
    $region7: #{tpu_custom_call.1} parent=1 // pred_check_branch
      %31 = sbr.rel (0) target = $region9
    $region8: #{tpu_custom_call.1} parent=1 // pred_region
      %s33 = ssub.s32 512, 512
      %34 = vsyncadd [#allocation6], %s33
      %s35 = sshll.u32 [#allocation5], 4
      %s36 = int_to_ptr.vmem [resolvable:$true] %s35
      %41 = dma.hbm_to_vmem [thread:$0]  %s1, 512, %s36, [#allocation6], 128, 128, 8
    $region9: #{tpu_custom_call.1} parent=1 // pred_fallthru
      _
    // Predicated region
    $region10: #{tpu_custom_call.1} parent=1 // pred_check
      _
    $region11: #{tpu_custom_call.1} parent=1 // pred_check_branch
      %43 = sbr.rel (0) target = $region13
    $region12: #{tpu_custom_call.1} parent=1 // pred_region
      _
    $region13: #{tpu_custom_call.1} parent=1 // pred_fallthru
      _
    // Predicated region
    $region14: #{tpu_custom_call.1} parent=1 // pred_check
      _
    $region15: #{tpu_custom_call.1} parent=1 // pred_check_branch
      %45 = sbr.rel (0) target = $region17
    $region16: #{tpu_custom_call.1} parent=1 // pred_region
      %s47 = ssub.s32 1024, 1024
      %48 = vsyncadd [#allocation6], %s47
      %s49 = sshll.u32 [#allocation7], 4
      %s50 = int_to_ptr.vmem [resolvable:$true] %s49
      %55 = dma.hbm_to_vmem [thread:$0]  %s3, 1024, %s50, [#allocation6], 128, 128, 8
    $region17: #{tpu_custom_call.1} parent=1 // pred_fallthru
      _
    // Predicated region
    $region18: #{tpu_custom_call.1} parent=1 // pred_check
      _
    $region19: #{tpu_custom_call.1} parent=1 // pred_check_branch
      %57 = sbr.rel (0) target = $region21
    $region20: #{tpu_custom_call.1} parent=1 // pred_region
      _
    $region21: #{tpu_custom_call.1} parent=1 // pred_fallthru
      _
    // Predicated region
    $region22: #{tpu_custom_call.1} parent=1 // pred_check
      _
    $region23: #{tpu_custom_call.1} parent=1 // pred_check_branch
      %59 = sbr.rel (0) target = $region25
    $region24: #{tpu_custom_call.1} parent=1 // pred_region
      %s61 = ssub.s32 4096, 4096
      %62 = vsyncadd [#allocation9], %s61
      %s63 = sshll.u32 [#allocation8], 4
      %s64 = int_to_ptr.vmem [resolvable:$true] %s63
      %69 = dma.hbm_to_vmem [thread:$0]  %s5, 4096, %s64, [#allocation9], 256, 256, 16
    $region25: #{tpu_custom_call.1} parent=1 // pred_fallthru
      _
    // Predicated region
    $region26: #{tpu_custom_call.1} parent=1 // pred_check
      _
    $region27: #{tpu_custom_call.1} parent=1 // pred_check_branch
      %71 = sbr.rel (0) target = $region29
    $region28: #{tpu_custom_call.1} parent=1 // pred_region
      _
    $region29: #{tpu_custom_call.1} parent=1 // pred_fallthru
      _
    // Predicated region
    $region30: #{tpu_custom_call.1} parent=1 // pred_check
      _
    $region31: #{tpu_custom_call.1} parent=1 // pred_check_branch
      %73 = sbr.rel (0) target = $region33
    $region32: #{tpu_custom_call.1} parent=1 // pred_region
      %s75 = ssub.s32 4096, 4096
      %76 = vsyncadd [#allocation9], %s75
      %s77 = sshll.u32 [#allocation10], 4
      %s78 = int_to_ptr.vmem [resolvable:$true] %s77
      %83 = dma.hbm_to_vmem [thread:$0]  %s7, 4096, %s78, [#allocation9], 128, 128, 8
    $region33: #{tpu_custom_call.1} parent=1 // pred_fallthru
      _
    // Predicated region
    $region34: #{tpu_custom_call.1} parent=1 // pred_check
      _
    $region35: #{tpu_custom_call.1} parent=1 // pred_check_branch
      %85 = sbr.rel (0) target = $region37
    $region36: #{tpu_custom_call.1} parent=1 // pred_region
      _
    $region37: #{tpu_custom_call.1} parent=1 // pred_fallthru
      _
    // Predicated region
    $region38: #{tpu_custom_call.1} parent=1 // pred_check
      _
    $region39: #{tpu_custom_call.1} parent=1 // pred_check_branch
      %87 = sbr.rel (0) target = $region41
    $region40: #{tpu_custom_call.1} parent=1 // pred_region
      %88 = dma.done [#allocation3], 256
    $region41: #{tpu_custom_call.1} parent=1 // pred_fallthru
      _
    // Predicated region
    $region42: #{tpu_custom_call.1} parent=1 // pred_check
      _
    $region43: #{tpu_custom_call.1} parent=1 // pred_check_branch
      %90 = sbr.rel (0) target = $region45
    $region44: #{tpu_custom_call.1} parent=1 // pred_region
      %91 = dma.done [#allocation6], 512
    $region45: #{tpu_custom_call.1} parent=1 // pred_fallthru
      _
    // Predicated region
    $region46: #{tpu_custom_call.1} parent=1 // pred_check
      _
    $region47: #{tpu_custom_call.1} parent=1 // pred_check_branch
      %93 = sbr.rel (0) target = $region49
    $region48: #{tpu_custom_call.1} parent=1 // pred_region
      %94 = dma.done [#allocation6], 1024
    $region49: #{tpu_custom_call.1} parent=1 // pred_fallthru
      _
    // Predicated region
    $region50: #{tpu_custom_call.1} parent=1 // pred_check
      _
    $region51: #{tpu_custom_call.1} parent=1 // pred_check_branch
      %96 = sbr.rel (0) target = $region53
    $region52: #{tpu_custom_call.1} parent=1 // pred_region
      %97 = dma.done [#allocation9], 4096
    $region53: #{tpu_custom_call.1} parent=1 // pred_fallthru
      _
    // Predicated region
    $region54: #{tpu_custom_call.1} parent=1 // pred_check
      _
    $region55: #{tpu_custom_call.1} parent=1 // pred_check_branch
      %99 = sbr.rel (0) target = $region57
    $region56: #{tpu_custom_call.1} parent=1 // pred_region
      %100 = dma.done [#allocation9], 4096
    $region57: #{tpu_custom_call.1} parent=1 // pred_fallthru
      _
    %v101 = vld [vmem:[#allocation2] sm:$0xff]
    %v102 = vld [vmem:[#allocation2 + $0x8] sm:$0xff]
    %v103 = vld [vmem:[#allocation5] sm:$0xff]
    %v104 = vld [vmem:[#allocation5 + $0x8] sm:$0xff]
    %v105 = vld [vmem:[#allocation5 + $0x10] sm:$0xff]
    %v106 = vld [vmem:[#allocation5 + $0x18] sm:$0xff]
    %v107 = vld [vmem:[%s2] sm:$0x1]
    %v109 = vlaneseq
    %v110 = vshrl.u32 %v109, 7
    %v111 = vsub.s32 0, %v110
    %v112 = vrot.slane %v107, %v111
    %vm114 = vcmask 261120
    %v116 = vsel %vm114, %v101, 0
    %v119 = vsel %vm114, %v102, 0
    %121 = vmatprep.subr.mxu0 0.0
    %122 = vmatpush1.msra.mxu0 %v103
    %123 = vmatprep.subr.mxu0 0.0
    %124 = vmatpush1.msra.mxu0 %v104
    %125 = vmatprep.subr.mxu0 0.0
    %126 = vmatpush1.msra.mxu0 %v105
    %127 = vmatprep.subr.mxu0 0.0
    %128 = vmatpush1.msra.mxu0 %v106
    %129 = vmatprep.subr.mxu0 0.0
    %130 = vmatpush1.msra.mxu0 0.0
    %131 = vmatprep.subr.mxu0 0.0
    %132 = vmatpush1.msra.mxu0 0.0
    %133 = vmatprep.subr.mxu0 0.0
    %134 = vmatpush1.msra.mxu0 0.0
    %135 = vmatprep.subr.mxu0 0.0
    %136 = vmatpush1.msra.mxu0 0.0
    %137 = vmatprep.subr.mxu0 0.0
    %138 = vmatpush1.msra.mxu0 0.0
    %139 = vmatprep.subr.mxu0 0.0
    %140 = vmatpush1.msra.mxu0 0.0
    %141 = vmatprep.subr.mxu0 0.0
    %142 = vmatpush1.msra.mxu0 0.0
    %143 = vmatprep.subr.mxu0 0.0
    %144 = vmatpush1.msra.mxu0 0.0
    %145 = vmatprep.subr.mxu0 0.0
    %146 = vmatpush1.msra.mxu0 0.0
    %147 = vmatprep.subr.mxu0 0.0
    %148 = vmatpush1.msra.mxu0 0.0
    %149 = vmatprep.subr.mxu0 0.0
    %150 = vmatpush1.msra.mxu0 0.0
    %151 = vmatprep.subr.mxu0 0.0
    %152 = vmatpush1.msra.mxu0 0.0
    %153 = vmatprep.subr.mxu0 0.0
    %154 = vmatpush1.msra.mxu0 0.0
    %155 = vmatprep.subr.mxu0 0.0
    %156 = vmatpush1.msra.mxu0 0.0
    %157 = vmatprep.subr.mxu0 0.0
    %158 = vmatpush1.msra.mxu0 0.0
    %159 = vmatprep.subr.mxu0 0.0
    %160 = vmatpush1.msra.mxu0 0.0
    %161 = vmatprep.subr.mxu0 0.0
    %162 = vmatpush1.msra.mxu0 0.0
    %163 = vmatprep.subr.mxu0 0.0
    %164 = vmatpush1.msra.mxu0 0.0
    %165 = vmatprep.subr.mxu0 0.0
    %166 = vmatpush1.msra.mxu0 0.0
    %167 = vmatprep.subr.mxu0 0.0
    %168 = vmatpush1.msra.mxu0 0.0
    %169 = vmatprep.subr.mxu0 0.0
    %170 = vmatpush1.msra.mxu0 0.0
    %171 = vmatprep.subr.mxu0 0.0
    %172 = vmatpush1.msra.mxu0 0.0
    %173 = vmatprep.subr.mxu0 0.0
    %174 = vmatpush1.msra.mxu0 0.0
    %175 = vmatprep.subr.mxu0 0.0
    %176 = vmatpush1.msra.mxu0 0.0
    %177 = vmatprep.subr.mxu0 0.0
    %178 = vmatpush1.msra.mxu0 0.0
    %179 = vmatprep.subr.mxu0 0.0
    %180 = vmatpush1.msra.mxu0 0.0
    %181 = vmatprep.subr.mxu0 0.0
    %182 = vmatpush1.msra.mxu0 0.0
    %183 = vmatprep.subr.mxu0 0.0
    %184 = vmatpush1.msra.mxu0 0.0
    %185 = vmatprep.mubr.f32.mxu0 0.0
    %186 = vmatmul.mubr.f32.gmra.mrb[0].mxu0 %v116
    %v187 = vpop.f32.mrb[0].mxu0
    %v188 = vadd.f32 %v112, %v187
    %v189 = vpop.f32.mrb[0].mxu0
    %190 = vmatprep.mubr.f32.mxu0 0.0
    %191 = vmatmul.mubr.f32.gmra.mrb[0].mxu0 %v119
    %v192 = vpop.f32.mrb[0].mxu0
    %v193 = vadd.f32 %v112, %v192
    %v194 = vpop.f32.mrb[0].mxu0
    %195 = vdwg.mxu0
    %v196 = vmax.f32 %v188, 0.0
    %v197 = vmax.f32 %v193, 0.0
    %v198 = vld [vmem:[#allocation7] sm:$0xff]
    %v199 = vld [vmem:[#allocation7 + $0x8] sm:$0xff]
    %v200 = vld [vmem:[#allocation7 + $0x10] sm:$0xff]
    %v201 = vld [vmem:[#allocation7 + $0x18] sm:$0xff]
    %v202 = vld [vmem:[#allocation7 + $0x20] sm:$0xff]
    %v203 = vld [vmem:[#allocation7 + $0x28] sm:$0xff]
    %v204 = vld [vmem:[#allocation7 + $0x30] sm:$0xff]
    %v205 = vld [vmem:[#allocation7 + $0x38] sm:$0xff]
    %v206 = vld [vmem:[%s4] sm:$0x1]
    %v208 = vlaneseq
    %v209 = vshrl.u32 %v208, 7
    %v210 = vsub.s32 0, %v209
    %v211 = vrot.slane %v206, %v210
    %vm213 = vcmask 523264
    %v215 = vsel %vm213, %v196, 0
    %v218 = vsel %vm213, %v197, 0
    %220 = vmatprep.subr.mxu0 0.0
    %221 = vmatpush1.msra.mxu0 %v198
    %222 = vmatprep.subr.mxu0 0.0
    %223 = vmatpush1.msra.mxu0 %v199
    %224 = vmatprep.subr.mxu0 0.0
    %225 = vmatpush1.msra.mxu0 %v200
    %226 = vmatprep.subr.mxu0 0.0
    %227 = vmatpush1.msra.mxu0 %v201
    %228 = vmatprep.subr.mxu0 0.0
    %229 = vmatpush1.msra.mxu0 %v202
    %230 = vmatprep.subr.mxu0 0.0
    %231 = vmatpush1.msra.mxu0 %v203
    %232 = vmatprep.subr.mxu0 0.0
    %233 = vmatpush1.msra.mxu0 %v204
    %234 = vmatprep.subr.mxu0 0.0
    %235 = vmatpush1.msra.mxu0 %v205
    %236 = vmatprep.subr.mxu0 0.0
    %237 = vmatpush1.msra.mxu0 0.0
    %238 = vmatprep.subr.mxu0 0.0
    %239 = vmatpush1.msra.mxu0 0.0
    %240 = vmatprep.subr.mxu0 0.0
    %241 = vmatpush1.msra.mxu0 0.0
    %242 = vmatprep.subr.mxu0 0.0
    %243 = vmatpush1.msra.mxu0 0.0
    %244 = vmatprep.subr.mxu0 0.0
    %245 = vmatpush1.msra.mxu0 0.0
    %246 = vmatprep.subr.mxu0 0.0
    %247 = vmatpush1.msra.mxu0 0.0
    %248 = vmatprep.subr.mxu0 0.0
    %249 = vmatpush1.msra.mxu0 0.0
    %250 = vmatprep.subr.mxu0 0.0
    %251 = vmatpush1.msra.mxu0 0.0
    %252 = vmatprep.subr.mxu0 0.0
    %253 = vmatpush1.msra.mxu0 0.0
    %254 = vmatprep.subr.mxu0 0.0
    %255 = vmatpush1.msra.mxu0 0.0
    %256 = vmatprep.subr.mxu0 0.0
    %257 = vmatpush1.msra.mxu0 0.0
    %258 = vmatprep.subr.mxu0 0.0
    %259 = vmatpush1.msra.mxu0 0.0
    %260 = vmatprep.subr.mxu0 0.0
    %261 = vmatpush1.msra.mxu0 0.0
    %262 = vmatprep.subr.mxu0 0.0
    %263 = vmatpush1.msra.mxu0 0.0
    %264 = vmatprep.subr.mxu0 0.0
    %265 = vmatpush1.msra.mxu0 0.0
    %266 = vmatprep.subr.mxu0 0.0
    %267 = vmatpush1.msra.mxu0 0.0
    %268 = vmatprep.subr.mxu0 0.0
    %269 = vmatpush1.msra.mxu0 0.0
    %270 = vmatprep.subr.mxu0 0.0
    %271 = vmatpush1.msra.mxu0 0.0
    %272 = vmatprep.subr.mxu0 0.0
    %273 = vmatpush1.msra.mxu0 0.0
    %274 = vmatprep.subr.mxu0 0.0
    %275 = vmatpush1.msra.mxu0 0.0
    %276 = vmatprep.subr.mxu0 0.0
    %277 = vmatpush1.msra.mxu0 0.0
    %278 = vmatprep.subr.mxu0 0.0
    %279 = vmatpush1.msra.mxu0 0.0
    %280 = vmatprep.subr.mxu0 0.0
    %281 = vmatpush1.msra.mxu0 0.0
    %282 = vmatprep.subr.mxu0 0.0
    %283 = vmatpush1.msra.mxu0 0.0
    %284 = vmatprep.mubr.f32.mxu0 0.0
    %285 = vmatmul.mubr.f32.gmra.mrb[0].mxu0 %v215
    %v286 = vpop.f32.mrb[0].mxu0
    %v287 = vadd.f32 %v211, %v286
    %v288 = vpop.f32.mrb[0].mxu0
    %289 = vmatprep.mubr.f32.mxu0 0.0
    %290 = vmatmul.mubr.f32.gmra.mrb[0].mxu0 %v218
    %v291 = vpop.f32.mrb[0].mxu0
    %v292 = vadd.f32 %v211, %v291
    %v293 = vpop.f32.mrb[0].mxu0
    %294 = vdwg.mxu0
    %v295 = vmax.f32 %v287, 0.0
    %v296 = vmax.f32 %v292, 0.0
    %v297 = vld [vmem:[#allocation8] sm:$0xff]
    %v298 = vld [vmem:[#allocation8 + $0x8] sm:$0xff]
    %v299 = vld [vmem:[#allocation8 + $0x10] sm:$0xff]
    %v300 = vld [vmem:[#allocation8 + $0x18] sm:$0xff]
    %v301 = vld [vmem:[#allocation8 + $0x20] sm:$0xff]
    %v302 = vld [vmem:[#allocation8 + $0x28] sm:$0xff]
    %v303 = vld [vmem:[#allocation8 + $0x30] sm:$0xff]
    %v304 = vld [vmem:[#allocation8 + $0x38] sm:$0xff]
    %v305 = vld [vmem:[#allocation8 + $0x40] sm:$0xff]
    %v306 = vld [vmem:[#allocation8 + $0x48] sm:$0xff]
    %v307 = vld [vmem:[#allocation8 + $0x50] sm:$0xff]
    %v308 = vld [vmem:[#allocation8 + $0x58] sm:$0xff]
    %v309 = vld [vmem:[#allocation8 + $0x60] sm:$0xff]
    %v310 = vld [vmem:[#allocation8 + $0x68] sm:$0xff]
    %v311 = vld [vmem:[#allocation8 + $0x70] sm:$0xff]
    %v312 = vld [vmem:[#allocation8 + $0x78] sm:$0xff]
    %v313 = vld [vmem:[#allocation8 + $0x80] sm:$0xff]
    %v314 = vld [vmem:[#allocation8 + $0x88] sm:$0xff]
    %v315 = vld [vmem:[#allocation8 + $0x90] sm:$0xff]
    %v316 = vld [vmem:[#allocation8 + $0x98] sm:$0xff]
    %v317 = vld [vmem:[#allocation8 + $0xa0] sm:$0xff]
    %v318 = vld [vmem:[#allocation8 + $0xa8] sm:$0xff]
    %v319 = vld [vmem:[#allocation8 + $0xb0] sm:$0xff]
    %v320 = vld [vmem:[#allocation8 + $0xb8] sm:$0xff]
    %v321 = vld [vmem:[#allocation8 + $0xc0] sm:$0xff]
    %v322 = vld [vmem:[#allocation8 + $0xc8] sm:$0xff]
    %v323 = vld [vmem:[#allocation8 + $0xd0] sm:$0xff]
    %v324 = vld [vmem:[#allocation8 + $0xd8] sm:$0xff]
    %v325 = vld [vmem:[#allocation8 + $0xe0] sm:$0xff]
    %v326 = vld [vmem:[#allocation8 + $0xe8] sm:$0xff]
    %v327 = vld [vmem:[#allocation8 + $0xf0] sm:$0xff]
    %v328 = vld [vmem:[#allocation8 + $0xf8] sm:$0xff]
    %v329 = vld [vmem:[%s6] sm:$0x3]
    %v331 = vlaneseq
    %v332 = vshrl.u32 %v331, 7
    %v333 = vsub.s32 0, %v332
    %v334 = vrot.slane %v329, %v333
    %v335 = vlaneseq
    %v336 = vshrl.u32 %v335, 7
    %v337 = vsub.s32 1, %v336
    %v338 = vrot.slane %v329, %v337
    %341 = vmatprep.subr.mxu0 %v298
    %342 = vmatpush1.msra.mxu0 %v297
    %343 = vmatprep.subr.mxu0 %v300
    %344 = vmatpush1.msra.mxu0 %v299
    %345 = vmatprep.subr.mxu0 %v302
    %346 = vmatpush1.msra.mxu0 %v301
    %347 = vmatprep.subr.mxu0 %v304
    %348 = vmatpush1.msra.mxu0 %v303
    %349 = vmatprep.subr.mxu0 %v306
    %350 = vmatpush1.msra.mxu0 %v305
    %351 = vmatprep.subr.mxu0 %v308
    %352 = vmatpush1.msra.mxu0 %v307
    %353 = vmatprep.subr.mxu0 %v310
    %354 = vmatpush1.msra.mxu0 %v309
    %355 = vmatprep.subr.mxu0 %v312
    %356 = vmatpush1.msra.mxu0 %v311
    %357 = vmatprep.subr.mxu0 %v314
    %358 = vmatpush1.msra.mxu0 %v313
    %359 = vmatprep.subr.mxu0 %v316
    %360 = vmatpush1.msra.mxu0 %v315
    %361 = vmatprep.subr.mxu0 %v318
    %362 = vmatpush1.msra.mxu0 %v317
    %363 = vmatprep.subr.mxu0 %v320
    %364 = vmatpush1.msra.mxu0 %v319
    %365 = vmatprep.subr.mxu0 %v322
    %366 = vmatpush1.msra.mxu0 %v321
    %367 = vmatprep.subr.mxu0 %v324
    %368 = vmatpush1.msra.mxu0 %v323
    %369 = vmatprep.subr.mxu0 %v326
    %370 = vmatpush1.msra.mxu0 %v325
    %371 = vmatprep.subr.mxu0 %v328
    %372 = vmatpush1.msra.mxu0 %v327
    %373 = vmatprep.subr.mxu0 0.0
    %374 = vmatpush1.msra.mxu0 0.0
    %375 = vmatprep.subr.mxu0 0.0
    %376 = vmatpush1.msra.mxu0 0.0
    %377 = vmatprep.subr.mxu0 0.0
    %378 = vmatpush1.msra.mxu0 0.0
    %379 = vmatprep.subr.mxu0 0.0
    %380 = vmatpush1.msra.mxu0 0.0
    %381 = vmatprep.subr.mxu0 0.0
    %382 = vmatpush1.msra.mxu0 0.0
    %383 = vmatprep.subr.mxu0 0.0
    %384 = vmatpush1.msra.mxu0 0.0
    %385 = vmatprep.subr.mxu0 0.0
    %386 = vmatpush1.msra.mxu0 0.0
    %387 = vmatprep.subr.mxu0 0.0
    %388 = vmatpush1.msra.mxu0 0.0
    %389 = vmatprep.subr.mxu0 0.0
    %390 = vmatpush1.msra.mxu0 0.0
    %391 = vmatprep.subr.mxu0 0.0
    %392 = vmatpush1.msra.mxu0 0.0
    %393 = vmatprep.subr.mxu0 0.0
    %394 = vmatpush1.msra.mxu0 0.0
    %395 = vmatprep.subr.mxu0 0.0
    %396 = vmatpush1.msra.mxu0 0.0
    %397 = vmatprep.subr.mxu0 0.0
    %398 = vmatpush1.msra.mxu0 0.0
    %399 = vmatprep.subr.mxu0 0.0
    %400 = vmatpush1.msra.mxu0 0.0
    %401 = vmatprep.subr.mxu0 0.0
    %402 = vmatpush1.msra.mxu0 0.0
    %403 = vmatprep.subr.mxu0 0.0
    %404 = vmatpush1.msra.mxu0 0.0
    %405 = vmatprep.mubr.f32.mxu0 0.0
    %406 = vmatmul.mubr.f32.gmra.mrb[0].mxu0 %v295
    %v407 = vpop.f32.mrb[0].mxu0
    %v408 = vadd.f32 %v334, %v407
    %v409 = vpop.f32.mrb[0].mxu0
    %v410 = vadd.f32 %v338, %v409
    %411 = vmatprep.mubr.f32.mxu0 0.0
    %412 = vmatmul.mubr.f32.gmra.mrb[0].mxu0 %v296
    %v413 = vpop.f32.mrb[0].mxu0
    %v414 = vadd.f32 %v334, %v413
    %v415 = vpop.f32.mrb[0].mxu0
    %v416 = vadd.f32 %v338, %v415
    %417 = vdwg.mxu0
    %v418 = vmax.f32 %v408, 0.0
    %v419 = vmax.f32 %v410, 0.0
    %v420 = vmax.f32 %v414, 0.0
    %v421 = vmax.f32 %v416, 0.0
    %v422 = vld [vmem:[#allocation10] sm:$0xff]
    %v423 = vld [vmem:[#allocation10 + $0x8] sm:$0xff]
    %v424 = vld [vmem:[#allocation10 + $0x10] sm:$0xff]
    %v425 = vld [vmem:[#allocation10 + $0x18] sm:$0xff]
    %v426 = vld [vmem:[#allocation10 + $0x20] sm:$0xff]
    %v427 = vld [vmem:[#allocation10 + $0x28] sm:$0xff]
    %v428 = vld [vmem:[#allocation10 + $0x30] sm:$0xff]
    %v429 = vld [vmem:[#allocation10 + $0x38] sm:$0xff]
    %v430 = vld [vmem:[#allocation10 + $0x40] sm:$0xff]
    %v431 = vld [vmem:[#allocation10 + $0x48] sm:$0xff]
    %v432 = vld [vmem:[#allocation10 + $0x50] sm:$0xff]
    %v433 = vld [vmem:[#allocation10 + $0x58] sm:$0xff]
    %v434 = vld [vmem:[#allocation10 + $0x60] sm:$0xff]
    %v435 = vld [vmem:[#allocation10 + $0x68] sm:$0xff]
    %v436 = vld [vmem:[#allocation10 + $0x70] sm:$0xff]
    %v437 = vld [vmem:[#allocation10 + $0x78] sm:$0xff]
    %v438 = vld [vmem:[#allocation10 + $0x80] sm:$0xff]
    %v439 = vld [vmem:[#allocation10 + $0x88] sm:$0xff]
    %v440 = vld [vmem:[#allocation10 + $0x90] sm:$0xff]
    %v441 = vld [vmem:[#allocation10 + $0x98] sm:$0xff]
    %v442 = vld [vmem:[#allocation10 + $0xa0] sm:$0xff]
    %v443 = vld [vmem:[#allocation10 + $0xa8] sm:$0xff]
    %v444 = vld [vmem:[#allocation10 + $0xb0] sm:$0xff]
    %v445 = vld [vmem:[#allocation10 + $0xb8] sm:$0xff]
    %v446 = vld [vmem:[#allocation10 + $0xc0] sm:$0xff]
    %v447 = vld [vmem:[#allocation10 + $0xc8] sm:$0xff]
    %v448 = vld [vmem:[#allocation10 + $0xd0] sm:$0xff]
    %v449 = vld [vmem:[#allocation10 + $0xd8] sm:$0xff]
    %v450 = vld [vmem:[#allocation10 + $0xe0] sm:$0xff]
    %v451 = vld [vmem:[#allocation10 + $0xe8] sm:$0xff]
    %v452 = vld [vmem:[#allocation10 + $0xf0] sm:$0xff]
    %v453 = vld [vmem:[#allocation10 + $0xf8] sm:$0xff]
    %v454 = vld [vmem:[%s8] sm:$0x1]
    %v456 = vlaneseq
    %v457 = vshrl.u32 %v456, 7
    %v458 = vsub.s32 0, %v457
    %v459 = vrot.slane %v454, %v458
    %461 = vmatprep.subr.mxu0 0.0
    %462 = vmatpush1.msra.mxu0 %v422
    %463 = vmatprep.subr.mxu0 0.0
    %464 = vmatpush1.msra.mxu0 %v423
    %465 = vmatprep.subr.mxu0 0.0
    %466 = vmatpush1.msra.mxu0 %v424
    %467 = vmatprep.subr.mxu0 0.0
    %468 = vmatpush1.msra.mxu0 %v425
    %469 = vmatprep.subr.mxu0 0.0
    %470 = vmatpush1.msra.mxu0 %v426
    %471 = vmatprep.subr.mxu0 0.0
    %472 = vmatpush1.msra.mxu0 %v427
    %473 = vmatprep.subr.mxu0 0.0
    %474 = vmatpush1.msra.mxu0 %v428
    %475 = vmatprep.subr.mxu0 0.0
    %476 = vmatpush1.msra.mxu0 %v429
    %477 = vmatprep.subr.mxu0 0.0
    %478 = vmatpush1.msra.mxu0 %v430
    %479 = vmatprep.subr.mxu0 0.0
    %480 = vmatpush1.msra.mxu0 %v431
    %481 = vmatprep.subr.mxu0 0.0
    %482 = vmatpush1.msra.mxu0 %v432
    %483 = vmatprep.subr.mxu0 0.0
    %484 = vmatpush1.msra.mxu0 %v433
    %485 = vmatprep.subr.mxu0 0.0
    %486 = vmatpush1.msra.mxu0 %v434
    %487 = vmatprep.subr.mxu0 0.0
    %488 = vmatpush1.msra.mxu0 %v435
    %489 = vmatprep.subr.mxu0 0.0
    %490 = vmatpush1.msra.mxu0 %v436
    %491 = vmatprep.subr.mxu0 0.0
    %492 = vmatpush1.msra.mxu0 %v437
    %493 = vmatprep.subr.mxu0 0.0
    %494 = vmatpush1.msra.mxu0 %v438
    %495 = vmatprep.subr.mxu0 0.0
    %496 = vmatpush1.msra.mxu0 %v439
    %497 = vmatprep.subr.mxu0 0.0
    %498 = vmatpush1.msra.mxu0 %v440
    %499 = vmatprep.subr.mxu0 0.0
    %500 = vmatpush1.msra.mxu0 %v441
    %501 = vmatprep.subr.mxu0 0.0
    %502 = vmatpush1.msra.mxu0 %v442
    %503 = vmatprep.subr.mxu0 0.0
    %504 = vmatpush1.msra.mxu0 %v443
    %505 = vmatprep.subr.mxu0 0.0
    %506 = vmatpush1.msra.mxu0 %v444
    %507 = vmatprep.subr.mxu0 0.0
    %508 = vmatpush1.msra.mxu0 %v445
    %509 = vmatprep.subr.mxu0 0.0
    %510 = vmatpush1.msra.mxu0 %v446
    %511 = vmatprep.subr.mxu0 0.0
    %512 = vmatpush1.msra.mxu0 %v447
    %513 = vmatprep.subr.mxu0 0.0
    %514 = vmatpush1.msra.mxu0 %v448
    %515 = vmatprep.subr.mxu0 0.0
    %516 = vmatpush1.msra.mxu0 %v449
    %517 = vmatprep.subr.mxu0 0.0
    %518 = vmatpush1.msra.mxu0 %v450
    %519 = vmatprep.subr.mxu0 0.0
    %520 = vmatpush1.msra.mxu0 %v451
    %521 = vmatprep.subr.mxu0 0.0
    %522 = vmatpush1.msra.mxu0 %v452
    %523 = vmatprep.subr.mxu0 0.0
    %524 = vmatpush1.msra.mxu0 %v453
    %525 = vmatprep.mubr.f32.mxu0 %v419
    %526 = vmatmul.mubr.f32.gmra.mrb[0].mxu0 %v418
    %v527 = vpop.f32.mrb[0].mxu0
    %v528 = vadd.f32 %v459, %v527
    %v529 = vpop.f32.mrb[0].mxu0
    %530 = vmatprep.mubr.f32.mxu0 %v421
    %531 = vmatmul.mubr.f32.gmra.mrb[0].mxu0 %v420
    %v532 = vpop.f32.mrb[0].mxu0
    %v533 = vadd.f32 %v459, %v532
    %v534 = vpop.f32.mrb[0].mxu0
    %535 = vdwg.mxu0
    %v536 = vmul.f32 %v528, 1.442695
    %v537 = vpow.pop %v536
    %v538 = vmul.f32 %v533, 1.442695
    %v539 = vpow.pop %v538
    %v540 = vxor.u32 %v528, 2147483648
    %v541 = vxor.u32 %v533, 2147483648
    %v542 = vmul.f32 %v540, 1.442695
    %v543 = vpow.pop %v542
    %v544 = vmul.f32 %v541, 1.442695
    %v545 = vpow.pop %v544
    %v546 = vadd.f32 %v543, 1.0
    %v547 = vadd.f32 %v545, 1.0
    %v548 = vrcp.pop %v546
    %v549 = vmul.f32 1.0, %v548
    %v550 = vrcp.pop %v547
    %v551 = vmul.f32 1.0, %v550
    %v552 = vmul.f32 %v549, 10.0
    %v553 = vmul.f32 %v551, 10.0
    %vm554 = vcmask 72752
    %v555 = vsel %vm554, %v528, -inf
    %556 = vmax.xlane.f32.xlu0 %v555
    %v557 = vpop.xlane.xlu0 %556
    %v558 = vsel %vm554, %v533, -inf
    %559 = vmax.xlane.f32.xlu0 %v558
    %v560 = vpop.xlane.xlu0 %559
    %v561 = vsub.f32 %v528, %v557
    %v562 = vsub.f32 %v533, %v560
    %v563 = vmul.f32 %v561, 1.442695
    %v564 = vpow.pop %v563
    %v565 = vmul.f32 %v562, 1.442695
    %v566 = vpow.pop %v565
    %569 = vrot.lane.b32.xlu0 %v564, 122
    %v570 = vpop.permute.xlu0 %569
    %571 = vrot.lane.b32.xlu0 %v566, 122
    %v572 = vpop.permute.xlu0 %571
    %vm575 = vcmask 23552
    %v576 = vsel %vm575, %v570, 0.0
    %577 = vadd.xlane.f32.xlu0 %v576
    %v578 = vpop.xlane.xlu0 %577
    %v579 = vsel %vm575, %v572, 0.0
    %580 = vadd.xlane.f32.xlu0 %v579
    %v581 = vpop.xlane.xlu0 %580
    %v582 = vrcp.pop %v578
    %v583 = vmul.f32 %v564, %v582
    %v584 = vrcp.pop %v581
    %v585 = vmul.f32 %v566, %v584
    %v586 = vsel %vm575, %v537, %v552
    %v587 = vsel %vm575, %v539, %v553
    %vm588 = vcmask 48128
    %v589 = vsel %vm588, %v586, %v583
    %v590 = vsel %vm588, %v587, %v585
    %vm591 = vcmask 72704
    %v592 = vsel %vm591, %v589, 0.0
    %v593 = vsel %vm591, %v590, 0.0
    %594 = vst [vmem:[#allocation11] sm:$0xff] %v592
    %595 = vst [vmem:[#allocation11 + $0x8] sm:$0xff] %v593
    // Predicated region
    $region58: #{tpu_custom_call.1} parent=1 // pred_check
      _
    $region59: #{tpu_custom_call.1} parent=1 // pred_check_branch
      %597 = sbr.rel (0) target = $region61
    $region60: #{tpu_custom_call.1} parent=1 // pred_region
      %s599 = ssub.s32 256, 256
      %600 = vsyncadd [#allocation4], %s599
      %s601 = sshll.u32 [#allocation11], 4
      %s602 = int_to_ptr.vmem [resolvable:$true] %s601
      %607 = dma.vmem_to_hbm [thread:$0]  %s602, 256, %s9, [#allocation4], 128, 128, 8
    $region61: #{tpu_custom_call.1} parent=1 // pred_fallthru
      _
    // Predicated region
    $region62: #{tpu_custom_call.1} parent=1 // pred_check
      _
    $region63: #{tpu_custom_call.1} parent=1 // pred_check_branch
      %609 = sbr.rel (0) target = $region65
    $region64: #{tpu_custom_call.1} parent=1 // pred_region
      %610 = dma.done [#allocation4], 256
    $region65: #{tpu_custom_call.1} parent=1 // pred_fallthru
      _
    %611 = vsyncpa [#allocation3], 1
    %612 = vsyncpa [#allocation6], 1
    %613 = vsyncpa [#allocation9], 1
    %614 = vsyncpa [#allocation4], 1

</llo_original>
